<compile_context>
chip_gen: v6e
topology: v6e:2x2x1
jax: 0.10.0
libtpu: 0.0.40
codegen_flags: <defaults>
</compile_context>

<pallas_src>
import jax
import jax.numpy as jnp
from jax.experimental import pallas as pl
from jax.experimental.pallas import tpu as pltpu

P_DROP = 0.2                                # nn.Dropout(p=0.2); module has no learnable params
_SCALE = 1.0 / (1.0 - P_DROP)               # inverted-dropout scaling (PyTorch semantics)
_THRESH = int(round(P_DROP * (1 << 24)))    # drop iff rbits < _THRESH, rbits ~ U[0, 2^24)


def _dropout_kernel(x_ref, bits_ref, o_ref):
    # Integer-threshold mask: one VPU compare per element, no float conversion.
    keep = bits_ref[...] >= jnp.int32(_THRESH)
    # Multiply stays in x's dtype (bf16 math on bf16 inputs, f32 on f32 inputs).
    o_ref[...] = jnp.where(keep, x_ref[...] * _SCALE, 0).astype(o_ref.dtype)


def _row_tile(n_rows, n_cols, itemsize):
    """Rows per tile: ~4 MiB resident per grid step (x + bits + out), so the
    double-buffered footprint (~8 MiB) fits v7x's 32 MiB scoped VMEM while
    staying large enough to amortize the ~0.35 us per-grid-step overhead."""
    bytes_per_row = n_cols * (2 * itemsize + 4)          # x tile + out tile + i32 bits
    budget = 4 * 1024 * 1024
    tb = max(1, budget // max(bytes_per_row, 1))
    if tb >= n_rows:
        return n_rows                                    # full-extent block (always legal)
    return max(8, (tb // 8) * 8)                         # keep sublane (8) alignment


def identity_feat_encoder(x, batch=None, *, training=True, key=None):
    """Pallas equivalent of IdentityFeatEncoder.forward(x, batch)."""
    del batch                                            # unused by the reference forward
    if not training:
        return x                                         # nn.Dropout is identity in eval mode

    if key is None:
        key = jax.random.PRNGKey(0)
    # TODO(synk): callers should thread a fresh `key` each training step, else the
    # dropout mask repeats across steps.

    orig_shape = x.shape
    x2 = x if x.ndim == 2 else x.reshape(x.shape[0], -1)  # (B, feat_dim), channels-last
    B, F = x2.shape

    # 24-bit uniform integers for the keep mask, generated in plain JAX (portable).
    rbits = (jax.random.bits(key, (B, F), dtype=jnp.uint32) >> 8).astype(jnp.int32)

    tb = _row_tile(B, F, jnp.dtype(x2.dtype).itemsize)
    grid = (pl.cdiv(B, tb),)

    out = pl.pallas_call(
        _dropout_kernel,
        out_shape=jax.ShapeDtypeStruct((B, F), x2.dtype),
        grid=grid,
        in_specs=[pl.BlockSpec((tb, F), lambda i: (i, 0)),
                  pl.BlockSpec((tb, F), lambda i: (i, 0))],
        out_specs=pl.BlockSpec((tb, F), lambda i: (i, 0)),
        compiler_params=pltpu.CompilerParams(
            dimension_semantics=("parallel",)),           # shard row grid across v7x's 2 TCs
    )(x2, rbits)

    return out.reshape(orig_shape)


if __name__ == "__main__":
    key = jax.random.PRNGKey(0)
    xkey, dkey = jax.random.split(key)

    # Small (batch, feat_dim) feature matrix consistent with the module.
    B, F = 8, 256
    x = jax.random.normal(xkey, (B, F), dtype=jnp.float32)
    batch = None                                          # `batch` is unused by the forward

    y = identity_feat_encoder(x, batch, training=True, key=dkey)
    y = jax.block_until_ready(y)

    assert y.shape == x.shape and y.dtype == x.dtype

    # Dropout semantics: every output is either 0 or x / (1 - p).
    zero_frac = float(jnp.mean(y == 0.0))
    nonzero = y != 0.0
    scale_ok = bool(jnp.allclose(jnp.where(nonzero, y, 0.0),
                                 jnp.where(nonzero, x / (1.0 - P_DROP), 0.0),
                                 rtol=1e-6, atol=1e-6))
    assert 0.05 < zero_frac < 0.4, f"unexpected drop fraction {zero_frac}"
    assert scale_ok, "kept elements are not scaled by 1/(1-p)"

    # Eval-mode path is an exact identity.
    y_eval = jax.block_until_ready(identity_feat_encoder(x, batch, training=False))
    assert bool(jnp.array_equal(y_eval, x))

    print("KERNEL_OK")
</pallas_src>

<mosaic_0001>
module attributes {stable_mosaic.version = 11 : i64} {
  func.func @_dropout_kernel(%arg0: i32, %arg1: memref<8x256xf32, #tpu.memory_space<vmem>>, %arg2: memref<8x256xi32, #tpu.memory_space<vmem>>, %arg3: memref<8x256xf32, #tpu.memory_space<vmem>>) attributes {dimension_semantics = [#tpu.dimension_semantics<parallel>], iteration_bounds = array<i64: 1>, scalar_prefetch = 0 : i64, scratch_operands = 0 : i64, tpu.core_type = #tpu.core_type<tc>, window_params = [{transform_indices = @transform_0, window_bounds = array<i64: 8, 256>}, {transform_indices = @transform_1, window_bounds = array<i64: 8, 256>}, {transform_indices = @transform_2, window_bounds = array<i64: 8, 256>}]} {
    %c0 = arith.constant 0 : index
    %c0_0 = arith.constant 0 : index
    %0 = vector.load %arg2[%c0, %c0_0] : memref<8x256xi32, #tpu.memory_space<vmem>>, vector<8x256xi32>
    %c3355443_i32 = arith.constant 3355443 : i32
    %1 = vector.broadcast %c3355443_i32 : i32 to vector<8x256xi32>
    %2 = arith.cmpi sge, %0, %1 : vector<8x256xi32>
    %c0_1 = arith.constant 0 : index
    %c0_2 = arith.constant 0 : index
    %3 = vector.load %arg1[%c0_1, %c0_2] : memref<8x256xf32, #tpu.memory_space<vmem>>, vector<8x256xf32>
    %cst = arith.constant 1.250000e+00 : f32
    %4 = vector.broadcast %cst : f32 to vector<8x256xf32>
    %5 = arith.mulf %3, %4 : vector<8x256xf32>
    %c0_i32 = arith.constant 0 : i32
    %6 = arith.sitofp %c0_i32 : i32 to f32
    %7 = vector.broadcast %6 : f32 to vector<8x256xf32>
    %8 = arith.select %2, %5, %7 : vector<8x256xi1>, vector<8x256xf32>
    %c0_3 = arith.constant 0 : index
    %c0_4 = arith.constant 0 : index
    %9 = vector.load %arg3[%c0_3, %c0_4] : memref<8x256xf32, #tpu.memory_space<vmem>>, vector<8x256xf32>
    tpu.vector_store %arg3[%c0_3, %c0_4], %8 {strides = array<i32>} : memref<8x256xf32, #tpu.memory_space<vmem>>, vector<8x256xf32>,
    return
  }
  func.func @transform_0(%arg0: i32) -> (i32, i32) {
    %c0_i32 = arith.constant 0 : i32
    %c0_i32_0 = arith.constant 0 : i32
    return %arg0, %c0_i32 : i32, i32
  }
  func.func @transform_1(%arg0: i32) -> (i32, i32) {
    %c0_i32 = arith.constant 0 : i32
    %c0_i32_0 = arith.constant 0 : i32
    return %arg0, %c0_i32 : i32, i32
  }
  func.func @transform_2(%arg0: i32) -> (i32, i32) {
    %c0_i32 = arith.constant 0 : i32
    %c0_i32_0 = arith.constant 0 : i32
    return %arg0, %c0_i32 : i32, i32
  }
}

</mosaic_0001>

<llo_original>
// kernel: tpu_custom_call.1
$region0: #{tpu_custom_call.1}
  #allocation0 [shape = 'u32[]', space=smem, size = 0x4, offset = 0x4, fixed_abs, tag = 'smem constant byte address 0x4 - core index']
  #allocation1 [shape = 'u32[144,128]{1,0:T(1,128)}', space=vmem, size = 0x12000, scoped, tag = 'internal scratch']
  %s0 = inlined_call_operand.hbm [shape: f32[8,256], index: 0, kind: input, shape index: {}]
  %s1 = inlined_call_operand.hbm [shape: s32[8,256], index: 1, kind: input, shape index: {}]
  %s2 = inlined_call_operand.hbm [shape: f32[8,256], index: 2, kind: output, shape index: {}]
  %s3 = sld [smem:[#allocation0]]
  $region26: #{tpu_custom_call.1} parent=0
    _
  %s5 = ssub.s32 1, %s3
  %s6 = scalar_select 0, %s5, %s3
  $region1: #{tpu_custom_call.1} parent=0
    #allocation2 [shape = 'u8[8192]{0}', space=vmem, size = 0x2000, scoped, tag = 'input window, operand 0, single buffered']
    #allocation3 [shape = 's32[1]{0}', space=sflag, size = 0x4, scoped, tag = 'scoped memory for tpu_custom_call.1']
    #allocation4 [shape = 's32[1]{0}', space=sflag, size = 0x4, scoped, tag = 'scoped memory for tpu_custom_call.1']
    #allocation5 [shape = 'u8[8192]{0}', space=vmem, size = 0x2000, scoped, tag = 'input window, operand 1, single buffered']
    #allocation6 [shape = 's32[1]{0}', space=sflag, size = 0x4, scoped, tag = 'scoped memory for tpu_custom_call.1']
    #allocation7 [shape = 'u8[8192]{0}', space=vmem, size = 0x2000, scoped, tag = 'output window, operand 0, single buffered']
    %7 = vsyncpa [#allocation3], 0
    %8 = vsyncpa [#allocation6], 0
    %9 = vsyncpa [#allocation4], 0
    // Predicated region
    $region2: #{tpu_custom_call.1} parent=1 // pred_check
      _
    $region3: #{tpu_custom_call.1} parent=1 // pred_check_branch
      %11 = sbr.rel (0) target = $region5
    $region4: #{tpu_custom_call.1} parent=1 // pred_region
      %s13 = ssub.s32 256, 256
      %14 = vsyncadd [#allocation3], %s13
      %s16 = sshll.u32 [#allocation2], 4
      %s17 = int_to_ptr.vmem [resolvable:$true] %s16
      %19 = dma.hbm_to_vmem [thread:$0]  %s0, 256, %s17, [#allocation3]
    $region5: #{tpu_custom_call.1} parent=1 // pred_fallthru
      _
    // Predicated region
    $region6: #{tpu_custom_call.1} parent=1 // pred_check
      _
    $region7: #{tpu_custom_call.1} parent=1 // pred_check_branch
      %21 = sbr.rel (0) target = $region9
    $region8: #{tpu_custom_call.1} parent=1 // pred_region
      %s23 = ssub.s32 256, 256
      %24 = vsyncadd [#allocation6], %s23
      %s26 = sshll.u32 [#allocation5], 4
      %s27 = int_to_ptr.vmem [resolvable:$true] %s26
      %29 = dma.hbm_to_vmem [thread:$0]  %s1, 256, %s27, [#allocation6]
    $region9: #{tpu_custom_call.1} parent=1 // pred_fallthru
      _
    // Predicated region
    $region10: #{tpu_custom_call.1} parent=1 // pred_check
      _
    $region11: #{tpu_custom_call.1} parent=1 // pred_check_branch
      %31 = sbr.rel (0) target = $region13
    $region12: #{tpu_custom_call.1} parent=1 // pred_region
      %32 = dma.done [#allocation3], 256
    $region13: #{tpu_custom_call.1} parent=1 // pred_fallthru
      _
    // Predicated region
    $region14: #{tpu_custom_call.1} parent=1 // pred_check
      _
    $region15: #{tpu_custom_call.1} parent=1 // pred_check_branch
      %34 = sbr.rel (0) target = $region17
    $region16: #{tpu_custom_call.1} parent=1 // pred_region
      %35 = dma.done [#allocation6], 256
    $region17: #{tpu_custom_call.1} parent=1 // pred_fallthru
      _
    %v36 = vld [vmem:[#allocation5] sm:$0xff]
    %v37 = vld [vmem:[#allocation5 + $0x8] sm:$0xff]
    %vm38 = vcmp.ge.s32.totalorder %v36, 3355443
    %vm39 = vcmp.ge.s32.totalorder %v37, 3355443
    %v40 = vld [vmem:[#allocation2] sm:$0xff]
    %v41 = vld [vmem:[#allocation2 + $0x8] sm:$0xff]
    %v42 = vmul.f32 %v40, 1.25
    %v43 = vmul.f32 %v41, 1.25
    %v44 = vsel %vm38, %v42, 0.0
    %v45 = vsel %vm39, %v43, 0.0
    %46 = vst [vmem:[#allocation7] sm:$0xff] %v44
    %47 = vst [vmem:[#allocation7 + $0x8] sm:$0xff] %v45
    // Predicated region
    $region18: #{tpu_custom_call.1} parent=1 // pred_check
      _
    $region19: #{tpu_custom_call.1} parent=1 // pred_check_branch
      %49 = sbr.rel (0) target = $region21
    $region20: #{tpu_custom_call.1} parent=1 // pred_region
      %s51 = ssub.s32 256, 256
      %52 = vsyncadd [#allocation4], %s51
      %s54 = sshll.u32 [#allocation7], 4
      %s55 = int_to_ptr.vmem [resolvable:$true] %s54
      %57 = dma.vmem_to_hbm [thread:$0]  %s55, 256, %s2, [#allocation4]
    $region21: #{tpu_custom_call.1} parent=1 // pred_fallthru
      _
    // Predicated region
    $region22: #{tpu_custom_call.1} parent=1 // pred_check
      _
    $region23: #{tpu_custom_call.1} parent=1 // pred_check_branch
      %59 = sbr.rel (0) target = $region25
    $region24: #{tpu_custom_call.1} parent=1 // pred_region
      %60 = dma.done [#allocation4], 256
    $region25: #{tpu_custom_call.1} parent=1 // pred_fallthru
      _
    %61 = vsyncpa [#allocation3], 1
    %62 = vsyncpa [#allocation6], 1
    %63 = vsyncpa [#allocation4], 1

</llo_original>
